<compile_context>
chip_gen: v7x
topology: tpu7x:2x2x1
jax: 0.10.0
libtpu: 0.0.40
codegen_flags: <defaults>
</compile_context>

<pallas_src>
import jax
import jax.numpy as jnp
from jax.experimental import pallas as pl
from jax.experimental.pallas import tpu as pltpu

MASK_VALUE = 0.0   # module default mask_value=0
MASK_FILL = 0.0    # module default mask_fill=0
KH = KW = 2        # conv kernel == stride == downsample ratio


def masked_conv_kernel(p_ref, w_ref, t_ref, b_ref, o_ref):
    # p_ref: (1, K, TM)   im2col patches^T (rows tap-major / channel-minor, M on lanes)
    # w_ref: (Cout, K)    conv weight flattened to match patch rows
    # t_ref: (Cin, K)     0/1 tap-selection matrix (row c picks the taps of channel c)
    # b_ref: (Cout, 1)    bias
    # o_ref: (1, Cout, TM) output block, already in flattened-NCHW layout
    p = p_ref[0]                                      # (K, TM), lane-dense
    w = w_ref[...]
    b = b_ref[...]

    # inner_module hot path: conv expressed as one MXU matmul (default precision).
    y = jnp.dot(w, p, preferred_element_type=jnp.float32) + b

    # downsampled mask: avg_pool2d(x == mask_value, ratio) == 1.0
    #   <=> every tap of the ratio x ratio window (per input channel) is masked.
    # Folded into a second (tiny) matmul instead of a per-tap compare/AND loop.
    ind = (p == MASK_VALUE).astype(jnp.float32)       # (K, TM)
    counts = jnp.dot(t_ref[...], ind, preferred_element_type=jnp.float32)  # (Cin, TM)
    n_taps = t_ref.shape[1] // t_ref.shape[0]         # == KH*KW (trace-time int)
    y_mask = counts > (n_taps - 0.5)                  # counts == n_taps (exact ints)

    # y[y_mask] = mask_fill  (Cout == Cin, so the per-channel mask lines up)
    o_ref[0] = jnp.where(y_mask, MASK_FILL, y).astype(o_ref.dtype)


def _round_up(a, b):
    return (a + b - 1) // b * b


def mask_output_based_on_input(x, w, b, tm_max=1024):
    """x: (N, C, H, W) NCHW f32; w: (Cout, Cin, KH, KW); b: (Cout,)."""
    n, cin, h, wd = x.shape
    cout, cin_w, kh_, kw_ = w.shape
    assert (kh_, kw_) == (KH, KW) and cin_w == cin
    assert cout == cin, "module's downsample() implicitly requires Cout == Cin"
    assert h % KH == 0 and wd % KW == 0
    ho, wo = h // KH, wd // KW
    k = KH * KW * cin
    m_per = ho * wo

    # glue: patches^T (N, K, Ho*Wo) -- free reshapes plus one XLA transpose pass,
    # with M on the lane axis so all kernel loads/stores are lane-dense.
    pT = x.reshape(n, cin, ho, KH, wo, KW)
    pT = pT.transpose(0, 3, 5, 1, 2, 4).reshape(n, k, m_per)   # (N, K, M)
    # TODO(synk): the input-side im2col transpose above is still one extra HBM
    # pass done by XLA; fully fusing it would need lane-strided (deinterleaving)
    # reads of NCHW x inside the kernel.

    w2 = w.transpose(0, 2, 3, 1).reshape(cout, k)               # (Cout, K)
    b2 = b.reshape(cout, 1)                                     # (Cout, 1)
    taps = (jnp.arange(k, dtype=jnp.int32) % cin ==
            jnp.arange(cin, dtype=jnp.int32)[:, None]).astype(jnp.float32)  # (Cin, K)

    # lane tiling: biggest 128-aligned tile up to tm_max; pad M instead of asserting.
    t_m = min(tm_max, _round_up(m_per, 128))
    m_pad = _round_up(m_per, t_m)
    if m_pad != m_per:
        pT = jnp.pad(pT, ((0, 0), (0, 0), (0, m_pad - m_per)))

    # double-buffered block budget (+ weights) with headroom; safe on v5e/v6e/v7x.
    vmem_need = 4 * (2 * (k + cout) * t_m + (cout + cin) * k + cout) + (1 << 20)
    vmem_limit = max(32 * 1024 * 1024, min(vmem_need, 48 * 1024 * 1024))

    out = pl.pallas_call(
        masked_conv_kernel,
        out_shape=jax.ShapeDtypeStruct((n, cout, m_pad), x.dtype),
        grid_spec=pltpu.PrefetchScalarGridSpec(
            num_scalar_prefetch=0,
            grid=(n, m_pad // t_m),
            in_specs=[
                pl.BlockSpec((1, k, t_m), lambda bi, mi: (bi, 0, mi)),  # patches^T
                pl.BlockSpec((cout, k), lambda bi, mi: (0, 0)),          # weight
                pl.BlockSpec((cin, k), lambda bi, mi: (0, 0)),           # tap matrix
                pl.BlockSpec((cout, 1), lambda bi, mi: (0, 0)),          # bias
            ],
            out_specs=pl.BlockSpec((1, cout, t_m), lambda bi, mi: (bi, 0, mi)),
        ),
        compiler_params=pltpu.CompilerParams(
            dimension_semantics=("parallel", "parallel"),
            vmem_limit_bytes=vmem_limit),
    )(pT, w2, taps, b2)

    # output already is flattened NCHW: trim lane padding + free reshape, no transpose.
    return out[:, :, :m_per].reshape(n, cout, ho, wo)


def _reference(x, w, b):
    """Pure-JAX reference of the PyTorch forward (for correctness check)."""
    y = jax.lax.conv_general_dilated(
        x, w, window_strides=(KH, KW), padding="VALID",
        dimension_numbers=("NCHW", "OIHW", "NCHW"),
        precision=jax.lax.Precision.HIGHEST) + b.reshape(1, -1, 1, 1)
    x_mask = (x == MASK_VALUE).astype(jnp.float32)
    pooled = jax.lax.reduce_window(
        x_mask, 0.0, jax.lax.add,
        window_dimensions=(1, 1, KH, KW),
        window_strides=(1, 1, KH, KW),
        padding="VALID") / float(KH * KW)
    y_mask = pooled == 1.0
    return jnp.where(y_mask, MASK_FILL, y)


if __name__ == "__main__":
    key = jax.random.PRNGKey(0)
    kx, kw, kb = jax.random.split(key, 3)

    N, C, H, W = 2, 4, 16, 16
    x = jax.random.normal(kx, (N, C, H, W), dtype=jnp.float32)
    # plant an exactly-masked region so the mask path is exercised
    x = x.at[:, :, 0:4, 0:4].set(MASK_VALUE)

    # deterministic synthetic parameters for inner_module Conv2d(C, C, 2, stride=2)
    w = jax.random.normal(kw, (C, C, KH, KW), dtype=jnp.float32) * 0.1
    b = jax.random.normal(kb, (C,), dtype=jnp.float32) * 0.1

    y = mask_output_based_on_input(x, w, b)
    y = jax.block_until_ready(y)

    y_ref = _reference(x, w, b)
    assert y.shape == (N, C, H // 2, W // 2)
    # kernel uses default MXU precision (perf feedback); allow bf16-pass tolerance
    assert jnp.allclose(y, y_ref, atol=2e-2, rtol=2e-2)
    # masked region must be exactly mask_fill
    assert jnp.all(y[:, :, 0:2, 0:2] == MASK_FILL)

    print("KERNEL_OK")
</pallas_src>

<mosaic_0001>
module attributes {stable_mosaic.version = 11 : i64} {
  func.func @masked_conv_kernel(%arg0: i32, %arg1: i32, %arg2: memref<1x16x128xf32, #tpu.memory_space<vmem>>, %arg3: memref<4x16xf32, #tpu.memory_space<vmem>>, %arg4: memref<4x16xf32, #tpu.memory_space<vmem>>, %arg5: memref<4x1xf32, #tpu.memory_space<vmem>>, %arg6: memref<1x4x128xf32, #tpu.memory_space<vmem>>) attributes {dimension_semantics = [#tpu.dimension_semantics<parallel>, #tpu.dimension_semantics<parallel>], iteration_bounds = array<i64: 2, 1>, scalar_prefetch = 0 : i64, scratch_operands = 0 : i64, tpu.core_type = #tpu.core_type<tc>, window_params = [{transform_indices = @transform_0, window_bounds = array<i64: 1, 16, 128>}, {pipeline_mode = #tpu.pipeline_mode<synchronous>, transform_indices = @transform_1, window_bounds = array<i64: 4, 16>}, {pipeline_mode = #tpu.pipeline_mode<synchronous>, transform_indices = @transform_2, window_bounds = array<i64: 4, 16>}, {pipeline_mode = #tpu.pipeline_mode<synchronous>, transform_indices = @transform_3, window_bounds = array<i64: 4, 1>}, {transform_indices = @transform_4, window_bounds = array<i64: 1, 4, 128>}]} {
    %c0 = arith.constant 0 : index
    %c0_0 = arith.constant 0 : index
    %c0_1 = arith.constant 0 : index
    %0 = vector.load %arg2[%c0, %c0_0, %c0_1] : memref<1x16x128xf32, #tpu.memory_space<vmem>>, vector<1x16x128xf32>
    %1 = vector.shape_cast %0 : vector<1x16x128xf32> to vector<16x128xf32>
    %c0_2 = arith.constant 0 : index
    %c0_3 = arith.constant 0 : index
    %2 = vector.load %arg3[%c0_2, %c0_3] : memref<4x16xf32, #tpu.memory_space<vmem>>, vector<4x16xf32>
    %c0_4 = arith.constant 0 : index
    %c0_5 = arith.constant 0 : index
    %3 = vector.load %arg5[%c0_4, %c0_5] : memref<4x1xf32, #tpu.memory_space<vmem>>, vector<4x1xf32>
    %cst = arith.constant dense<0.000000e+00> : vector<4x128xf32>
    %4 = tpu.matmul %2, %1, %cst {dimension_numbers = #tpu.dot_dimension_numbers<[1], [0], [0], [1], [0, 0, 1, 1], [], []>} : vector<4x16xf32>, vector<16x128xf32>, vector<4x128xf32> -> vector<4x128xf32>
    %5 = vector.broadcast %3 : vector<4x1xf32> to vector<4x128xf32>
    %6 = arith.addf %4, %5 : vector<4x128xf32>
    %cst_6 = arith.constant 0.000000e+00 : f32
    %7 = vector.broadcast %cst_6 : f32 to vector<16x128xf32>
    %8 = arith.cmpf oeq, %1, %7 : vector<16x128xf32>
    %9 = arith.extui %8 : vector<16x128xi1> to vector<16x128xi32>
    %10 = arith.sitofp %9 : vector<16x128xi32> to vector<16x128xf32>
    %c0_7 = arith.constant 0 : index
    %c0_8 = arith.constant 0 : index
    %11 = vector.load %arg4[%c0_7, %c0_8] : memref<4x16xf32, #tpu.memory_space<vmem>>, vector<4x16xf32>
    %cst_9 = arith.constant dense<0.000000e+00> : vector<4x128xf32>
    %12 = tpu.matmul %11, %10, %cst_9 {dimension_numbers = #tpu.dot_dimension_numbers<[1], [0], [0], [1], [0, 0, 1, 1], [], []>} : vector<4x16xf32>, vector<16x128xf32>, vector<4x128xf32> -> vector<4x128xf32>
    %cst_10 = arith.constant 3.500000e+00 : f32
    %13 = vector.broadcast %cst_10 : f32 to vector<4x128xf32>
    %14 = arith.cmpf ogt, %12, %13 : vector<4x128xf32>
    %cst_11 = arith.constant 0.000000e+00 : f32
    %15 = vector.broadcast %cst_11 : f32 to vector<4x128xf32>
    %16 = arith.select %14, %15, %6 : vector<4x128xi1>, vector<4x128xf32>
    %c0_12 = arith.constant 0 : index
    %c0_13 = arith.constant 0 : index
    %c0_14 = arith.constant 0 : index
    %17 = vector.load %arg6[%c0_12, %c0_13, %c0_14] : memref<1x4x128xf32, #tpu.memory_space<vmem>>, vector<1x4x128xf32>
    %18 = vector.shape_cast %17 : vector<1x4x128xf32> to vector<4x128xf32>
    %19 = vector.shape_cast %16 : vector<4x128xf32> to vector<1x4x128xf32>
    tpu.vector_store %arg6[%c0_12, %c0_13, %c0_14], %19 {strides = array<i32>} : memref<1x4x128xf32, #tpu.memory_space<vmem>>, vector<1x4x128xf32>,
    return
  }
  func.func @transform_0(%arg0: i32, %arg1: i32) -> (i32, i32, i32) {
    %c0_i32 = arith.constant 0 : i32
    %c0_i32_0 = arith.constant 0 : i32
    return %arg0, %c0_i32, %arg1 : i32, i32, i32
  }
  func.func @transform_1(%arg0: i32, %arg1: i32) -> (i32, i32) {
    %c0_i32 = arith.constant 0 : i32
    %c0_i32_0 = arith.constant 0 : i32
    %c0_i32_1 = arith.constant 0 : i32
    return %c0_i32, %c0_i32_0 : i32, i32
  }
  func.func @transform_2(%arg0: i32, %arg1: i32) -> (i32, i32) {
    %c0_i32 = arith.constant 0 : i32
    %c0_i32_0 = arith.constant 0 : i32
    %c0_i32_1 = arith.constant 0 : i32
    return %c0_i32, %c0_i32_0 : i32, i32
  }
  func.func @transform_3(%arg0: i32, %arg1: i32) -> (i32, i32) {
    %c0_i32 = arith.constant 0 : i32
    %c0_i32_0 = arith.constant 0 : i32
    %c0_i32_1 = arith.constant 0 : i32
    return %c0_i32, %c0_i32_0 : i32, i32
  }
  func.func @transform_4(%arg0: i32, %arg1: i32) -> (i32, i32, i32) {
    %c0_i32 = arith.constant 0 : i32
    %c0_i32_0 = arith.constant 0 : i32
    return %arg0, %c0_i32, %arg1 : i32, i32, i32
  }
}

</mosaic_0001>

<llo_original>
// kernel: tpu_custom_call.1
$region0: #{tpu_custom_call.1}
  #allocation0 [shape = 'u32[]', space=smem, size = 0x4, offset = 0x4, fixed_abs, tag = 'smem constant byte address 0x4 - core index']
  #allocation1 [shape = 'u32[144,128]{1,0:T(1,128)}', space=vmem, size = 0x12000, scoped, tag = 'internal scratch']
  %s0 = inlined_call_operand.hbm [shape: f32[2,16,128], index: 0, kind: input, shape index: {}]
  %s1 = inlined_call_operand.vmem [shape: f32[4,16], index: 1, kind: input, shape index: {}]
  %s2 = inlined_call_operand.vmem [shape: f32[4,16], index: 2, kind: input, shape index: {}]
  %s3 = inlined_call_operand.vmem [shape: f32[4,1], index: 3, kind: input, shape index: {}]
  %s4 = inlined_call_operand.hbm [shape: f32[2,4,128], index: 4, kind: output, shape index: {}]
  %s5 = sld [smem:[#allocation0]]
  $region53: #{tpu_custom_call.1} parent=0
    _
  %s7 = ssub.s32 1, %s5
  %s8 = scalar_select 0, %s7, %s5
  $region1: #{tpu_custom_call.1} parent=0
    #allocation2 [shape = 'u8[16384]{0}', space=vmem, size = 0x4000, scoped, tag = 'input window, operand 0']
    #allocation3 [shape = 's32[2]{0}', space=sflag, size = 0x8, scoped, tag = 'scoped memory for tpu_custom_call.1']
    #allocation4 [shape = 's32[2]{0}', space=sflag, size = 0x8, scoped, tag = 'scoped memory for tpu_custom_call.1']
    #allocation5 [shape = 'u8[4096]{0}', space=vmem, size = 0x1000, scoped, tag = 'output window, operand 0']
    %9 = vsyncpa [#allocation3], 0
    %s10 = scalar_lea.sflag [#allocation3], 1
    %11 = vsyncpa %s10, 0
    %12 = vsyncpa [#allocation4], 0
    %s13 = scalar_lea.sflag [#allocation4], 1
    %14 = vsyncpa %s13, 0
    loop: start=0, step=1, limit=4
    $region2: #{tpu_custom_call.1} parent=1 // loop_pre_header
      _
    $region3: #{tpu_custom_call.1} parent=1 // loop_header
      %s16 = sphi 0, %s20
      %p17 = scmp.ge.s32.totalorder %s16, 4
      %s23 = sphi 0, %s35
      %s24 = sphi 0, %s31
      %s25 = sphi 0, %s23
      %s26 = sphi 0, %s24
      %s27 = sphi 0, %s25
      %s28 = sphi 0, %s26
      %s40 = sphi 0, %s42
      %s43 = sphi 0, %s40
      %s44 = sphi 0, %s43
      %s60 = sphi 0, %s44
      %s64 = sphi 0, %s64
      %s66 = sphi 0, %s64
      %s67 = sphi 0, %s66
      %s81 = sphi 0, %s67
      %s85 = sphi 0, %s85
      %s87 = sphi 0, %s85
      %s88 = sphi 0, %s87
      %s102 = sphi 0, %s88
      %s106 = sphi 0, %s106
      %s108 = sphi 0, %s106
      %s109 = sphi 0, %s108
      %s123 = sphi 0, %s109
      %s131 = sphi 0, %s133
      %s134 = sphi 0, %s131
      %s135 = sphi 0, %s134
      %s151 = sphi 0, %s135
    $region4: #{tpu_custom_call.1} parent=1 // loop_header_branch
      %19 = sbr.rel (%p17) target = $region8
    $region5: #{tpu_custom_call.1} parent=1 // loop_body
      %s21 = ssub.s32 %s16, 1
      %s22 = ssub.s32 %s16, 2
      %s29 = sadd.s32 1, %s24
      %p30 = scmp.ge.s32.totalorder %s29, 1
      %s31 = scalar_select %p30, 0, %s29
      %s32 = sadd.s32 1, %s23
      %s33 = scalar_select %p30, %s32, %s23
      %p34 = scmp.ge.s32.totalorder %s33, 2
      %s35 = scalar_select %p34, 0, %s33
      %s36 = ssub.s32 %s23, %s35
      %s37 = ssub.s32 %s24, %s31
      %s38 = sor.u32 %s36, %s37
      %p39 = scmp.eq.s32.totalorder %s38, 0
      %s41 = sadd.s32 %s40, 1
      %s42 = scalar_select %p39, %s40, %s41
      %p45 = pneg %p39
      %p46 = scmp.eq.s32.totalorder %s16, 1
      %p47 = por %p45, %p46
      %p48 = scmp.ne.s32.totalorder %s40, %s43
      %p49 = scmp.eq.s32.totalorder %s16, 0
      %p50 = por %p48, %p49
      %p51 = scmp.ne.s32.totalorder %s40, %s43
      %p52 = scmp.eq.s32.totalorder %s21, 1
      %p53 = por %p51, %p52
      %p54 = scmp.ne.s32.totalorder %s43, %s44
      %p55 = scmp.eq.s32.totalorder %s21, 0
      %p56 = por %p54, %p55
      %p57 = scmp.ne.s32.totalorder %s43, %s44
      %p58 = scmp.eq.s32.totalorder %s22, 1
      %p59 = por %p57, %p58
      %p61 = scmp.ne.s32.totalorder %s44, %s60
      %p62 = scmp.eq.s32.totalorder %s22, 0
      %p63 = por %p61, %p62
      %s65 = sadd.s32 %s64, 1
      %p68 = scmp.eq.s32.totalorder %s16, 1
      %p69 = scmp.ne.s32.totalorder %s64, %s66
      %p70 = scmp.eq.s32.totalorder %s16, 0
      %p71 = por %p69, %p70
      %p72 = scmp.ne.s32.totalorder %s64, %s66
      %p73 = scmp.eq.s32.totalorder %s21, 1
      %p74 = por %p72, %p73
      %p75 = scmp.ne.s32.totalorder %s66, %s67
      %p76 = scmp.eq.s32.totalorder %s21, 0
      %p77 = por %p75, %p76
      %p78 = scmp.ne.s32.totalorder %s66, %s67
      %p79 = scmp.eq.s32.totalorder %s22, 1
      %p80 = por %p78, %p79
      %p82 = scmp.ne.s32.totalorder %s67, %s81
      %p83 = scmp.eq.s32.totalorder %s22, 0
      %p84 = por %p82, %p83
      %s86 = sadd.s32 %s85, 1
      %p89 = scmp.eq.s32.totalorder %s16, 1
      %p90 = scmp.ne.s32.totalorder %s85, %s87
      %p91 = scmp.eq.s32.totalorder %s16, 0
      %p92 = por %p90, %p91
      %p93 = scmp.ne.s32.totalorder %s85, %s87
      %p94 = scmp.eq.s32.totalorder %s21, 1
      %p95 = por %p93, %p94
      %p96 = scmp.ne.s32.totalorder %s87, %s88
      %p97 = scmp.eq.s32.totalorder %s21, 0
      %p98 = por %p96, %p97
      %p99 = scmp.ne.s32.totalorder %s87, %s88
      %p100 = scmp.eq.s32.totalorder %s22, 1
      %p101 = por %p99, %p100
      %p103 = scmp.ne.s32.totalorder %s88, %s102
      %p104 = scmp.eq.s32.totalorder %s22, 0
      %p105 = por %p103, %p104
      %s107 = sadd.s32 %s106, 1
      %p110 = scmp.eq.s32.totalorder %s16, 1
      %p111 = scmp.ne.s32.totalorder %s106, %s108
      %p112 = scmp.eq.s32.totalorder %s16, 0
      %p113 = por %p111, %p112
      %p114 = scmp.ne.s32.totalorder %s106, %s108
      %p115 = scmp.eq.s32.totalorder %s21, 1
      %p116 = por %p114, %p115
      %p117 = scmp.ne.s32.totalorder %s108, %s109
      %p118 = scmp.eq.s32.totalorder %s21, 0
      %p119 = por %p117, %p118
      %p120 = scmp.ne.s32.totalorder %s108, %s109
      %p121 = scmp.eq.s32.totalorder %s22, 1
      %p122 = por %p120, %p121
      %p124 = scmp.ne.s32.totalorder %s109, %s123
      %p125 = scmp.eq.s32.totalorder %s22, 0
      %p126 = por %p124, %p125
      %s127 = ssub.s32 %s23, %s35
      %s128 = ssub.s32 %s24, %s31
      %s129 = sor.u32 %s127, %s128
      %p130 = scmp.eq.s32.totalorder %s129, 0
      %s132 = sadd.s32 %s131, 1
      %s133 = scalar_select %p130, %s131, %s132
      %p136 = pneg %p130
      %p137 = scmp.eq.s32.totalorder %s16, 1
      %p138 = por %p136, %p137
      %p139 = scmp.ne.s32.totalorder %s131, %s134
      %p140 = scmp.eq.s32.totalorder %s16, 0
      %p141 = por %p139, %p140
      %p142 = scmp.ne.s32.totalorder %s131, %s134
      %p143 = scmp.eq.s32.totalorder %s21, 1
      %p144 = por %p142, %p143
      %p145 = scmp.ne.s32.totalorder %s134, %s135
      %p146 = scmp.eq.s32.totalorder %s21, 0
      %p147 = por %p145, %p146
      %p148 = scmp.ne.s32.totalorder %s134, %s135
      %p149 = scmp.eq.s32.totalorder %s22, 1
      %p150 = por %p148, %p149
      %p152 = scmp.ne.s32.totalorder %s135, %s151
      %p153 = scmp.eq.s32.totalorder %s22, 0
      %p154 = por %p152, %p153
      %p155 = scmp.le.s32.totalorder 1, %s16
      %p156 = scmp.lt.s32.totalorder %s16, 3
      %p157 = pnand %p155, %p156
      %p158 = pneg %p157
      // Predicated region
      $region9: #{tpu_custom_call.1} parent=5 // pred_check
        _
      $region10: #{tpu_custom_call.1} parent=5 // pred_check_branch
        %160 = sbr.rel (%p157) target = $region12
      $region11: #{tpu_custom_call.1} parent=5 // pred_region
        %s161 = ssub.s32 %s16, 1
        // Predicated region
        $region13: #{tpu_custom_call.1} parent=11 // pred_check
          %p162 = pneg %p77
        $region14: #{tpu_custom_call.1} parent=11 // pred_check_branch
          %164 = sbr.rel (%p162) target = $region16
        $region15: #{tpu_custom_call.1} parent=11 // pred_region
          _
        $region16: #{tpu_custom_call.1} parent=11 // pred_fallthru
          _
        // Predicated region
        $region17: #{tpu_custom_call.1} parent=11 // pred_check
          %p165 = pneg %p98
        $region18: #{tpu_custom_call.1} parent=11 // pred_check_branch
          %167 = sbr.rel (%p165) target = $region20
        $region19: #{tpu_custom_call.1} parent=11 // pred_region
          _
        $region20: #{tpu_custom_call.1} parent=11 // pred_fallthru
          _
        // Predicated region
        $region21: #{tpu_custom_call.1} parent=11 // pred_check
          %p168 = pneg %p119
        $region22: #{tpu_custom_call.1} parent=11 // pred_check_branch
          %170 = sbr.rel (%p168) target = $region24
        $region23: #{tpu_custom_call.1} parent=11 // pred_region
          _
        $region24: #{tpu_custom_call.1} parent=11 // pred_fallthru
          _
      $region12: #{tpu_custom_call.1} parent=5 // pred_fallthru
        _
      %p171 = scmp.lt.s32.totalorder %s16, 2
      // Predicated region
      $region25: #{tpu_custom_call.1} parent=5 // pred_check
        %p172 = pneg %p171
      $region26: #{tpu_custom_call.1} parent=5 // pred_check_branch
        %174 = sbr.rel (%p172) target = $region28
      $region27: #{tpu_custom_call.1} parent=5 // pred_region
        // Predicated region
        $region29: #{tpu_custom_call.1} parent=27 // pred_check
          %p175 = pneg %p50
        $region30: #{tpu_custom_call.1} parent=27 // pred_check_branch
          %177 = sbr.rel (%p175) target = $region32
        $region31: #{tpu_custom_call.1} parent=27 // pred_region
          %s178 = sand.u32 %s40, 1
          %s179 = scalar_lea.sflag [#allocation3], %s178
          %s180 = sand.u32 %s40, 1
          %s181 = smul.addr %s180, 16
          %s182 = scalar_lea.vmem [#allocation2], %s181
          %s184 = ssub.s32 256, 256
          %185 = vsyncadd %s179, %s184
          %s186 = smul.addr %s23, 2
          %s187 = sadd.s32 %s24, %s186
          %s188 = smul.addr %s187, 128
          %s189 = scalar_lea.hbm %s0, %s188
          %s190 = sshll.u32 %s182, 4
          %s191 = int_to_ptr.vmem [resolvable:$true] %s190
          %196 = dma.hbm_to_vmem [thread:$0]  %s189, 256, %s191, %s179, 128, 128, 8
        $region32: #{tpu_custom_call.1} parent=27 // pred_fallthru
          _
      $region28: #{tpu_custom_call.1} parent=5 // pred_fallthru
        _
      %p197 = scmp.le.s32.totalorder 1, %s16
      %p198 = scmp.lt.s32.totalorder %s16, 3
      %p199 = pnand %p197, %p198
      %p200 = pneg %p199
      // Predicated region
      $region33: #{tpu_custom_call.1} parent=5 // pred_check
        _
      $region34: #{tpu_custom_call.1} parent=5 // pred_check_branch
        %202 = sbr.rel (%p199) target = $region36
      $region35: #{tpu_custom_call.1} parent=5 // pred_region
        %s203 = ssub.s32 %s16, 1
        %s204 = sand.u32 %s43, 1
        %s205 = scalar_lea.sflag [#allocation3], %s204
        %s206 = sand.u32 %s43, 1
        %s207 = smul.addr %s206, 16
        %s208 = scalar_lea.vmem [#allocation2], %s207
        // Predicated region
        $region37: #{tpu_custom_call.1} parent=35 // pred_check
          %p209 = pneg %p56
        $region38: #{tpu_custom_call.1} parent=35 // pred_check_branch
          %211 = sbr.rel (%p209) target = $region40
        $region39: #{tpu_custom_call.1} parent=35 // pred_region
          %212 = dma.done %s205, 256
        $region40: #{tpu_custom_call.1} parent=35 // pred_fallthru
          _
        %s213 = sand.u32 %s43, 1
        %s214 = scalar_lea.sflag [#allocation3], %s213
        %s215 = sand.u32 %s43, 1
        %s216 = smul.addr %s215, 16
        %s217 = scalar_lea.vmem [#allocation2], %s216
        %p218 = pneg %p56
        %p219 = pneg %p53
        %p220 = pneg %p77
        %p221 = pneg %p74
        %p222 = pneg %p98
        %p223 = pneg %p95
        %p224 = pneg %p119
        %p225 = pneg %p116
        %p226 = pneg %p147
        %p227 = pneg %p144
        %s228 = sand.u32 %s134, 1
        %s229 = scalar_lea.sflag [#allocation4], %s228
        %s230 = sand.u32 %s134, 1
        %s231 = smul.addr %s230, 4
        %s232 = scalar_lea.vmem [#allocation5], %s231
        %v233 = vld [vmem:[%s208] sm:$0xff]
        %v234 = vld [vmem:[%s208 + $0x8] sm:$0xff]
        %v235 = vld [vmem:[%s1] sm:$0xf]
        %v236 = vld [vmem:[%s3] sm:$0xf]
        %238 = vset.pattern.permute.xlu0 0
        %239 = vperm.xlu0 %238, %v236
        %v240 = vpop.permute.xlu0 %239
        %vm242 = vcmask 130048
        %v244 = vsel %vm242, %v235, 0
        %246 = vmatprep.subr.mxu0 0.0
        %247 = vmatpush1.msra.mxu0 %v233
        %248 = vmatprep.subr.mxu0 0.0
        %249 = vmatpush1.msra.mxu0 %v234
        %250 = vmatprep.subr.mxu0 0.0
        %251 = vmatpush1.msra.mxu0 0.0
        %252 = vmatprep.subr.mxu0 0.0
        %253 = vmatpush1.msra.mxu0 0.0
        %254 = vmatprep.subr.mxu0 0.0
        %255 = vmatpush1.msra.mxu0 0.0
        %256 = vmatprep.subr.mxu0 0.0
        %257 = vmatpush1.msra.mxu0 0.0
        %258 = vmatprep.subr.mxu0 0.0
        %259 = vmatpush1.msra.mxu0 0.0
        %260 = vmatprep.subr.mxu0 0.0
        %261 = vmatpush1.msra.mxu0 0.0
        %262 = vmatprep.subr.mxu0 0.0
        %263 = vmatpush1.msra.mxu0 0.0
        %264 = vmatprep.subr.mxu0 0.0
        %265 = vmatpush1.msra.mxu0 0.0
        %266 = vmatprep.subr.mxu0 0.0
        %267 = vmatpush1.msra.mxu0 0.0
        %268 = vmatprep.subr.mxu0 0.0
        %269 = vmatpush1.msra.mxu0 0.0
        %270 = vmatprep.subr.mxu0 0.0
        %271 = vmatpush1.msra.mxu0 0.0
        %272 = vmatprep.subr.mxu0 0.0
        %273 = vmatpush1.msra.mxu0 0.0
        %274 = vmatprep.subr.mxu0 0.0
        %275 = vmatpush1.msra.mxu0 0.0
        %276 = vmatprep.subr.mxu0 0.0
        %277 = vmatpush1.msra.mxu0 0.0
        %278 = vmatprep.subr.mxu0 0.0
        %279 = vmatpush1.msra.mxu0 0.0
        %280 = vmatprep.subr.mxu0 0.0
        %281 = vmatpush1.msra.mxu0 0.0
        %282 = vmatprep.subr.mxu0 0.0
        %283 = vmatpush1.msra.mxu0 0.0
        %284 = vmatprep.subr.mxu0 0.0
        %285 = vmatpush1.msra.mxu0 0.0
        %286 = vmatprep.subr.mxu0 0.0
        %287 = vmatpush1.msra.mxu0 0.0
        %288 = vmatprep.subr.mxu0 0.0
        %289 = vmatpush1.msra.mxu0 0.0
        %290 = vmatprep.subr.mxu0 0.0
        %291 = vmatpush1.msra.mxu0 0.0
        %292 = vmatprep.subr.mxu0 0.0
        %293 = vmatpush1.msra.mxu0 0.0
        %294 = vmatprep.subr.mxu0 0.0
        %295 = vmatpush1.msra.mxu0 0.0
        %296 = vmatprep.subr.mxu0 0.0
        %297 = vmatpush1.msra.mxu0 0.0
        %298 = vmatprep.subr.mxu0 0.0
        %299 = vmatpush1.msra.mxu0 0.0
        %300 = vmatprep.subr.mxu0 0.0
        %301 = vmatpush1.msra.mxu0 0.0
        %302 = vmatprep.subr.mxu0 0.0
        %303 = vmatpush1.msra.mxu0 0.0
        %304 = vmatprep.subr.mxu0 0.0
        %305 = vmatpush1.msra.mxu0 0.0
        %306 = vmatprep.subr.mxu0 0.0
        %307 = vmatpush1.msra.mxu0 0.0
        %308 = vmatprep.subr.mxu0 0.0
        %309 = vmatpush1.msra.mxu0 0.0
        %310 = vmatprep.mubr.f32.mxu0 0.0
        %311 = vmatmul.mubr.f32.gmra.mrb[0].mxu0 %v244
        %v312 = vpop.f32.mrb[0].mxu0
        %v313 = vadd.f32 %v240, %v312
        %v314 = vpop.f32.mrb[0].mxu0
        %315 = vdwg.mxu0
        %vm316 = vcmp.eq.f32.partialorder %v233, 0.0
        %vm317 = vcmp.eq.f32.partialorder %v234, 0.0
        %v318 = vsel %vm316, 1, 0
        %v319 = vsel %vm317, 1, 0
        %v320 = vcvt.s32.f32 %v318
        %v321 = vcvt.s32.f32 %v319
        %v322 = vld [vmem:[%s2] sm:$0xf]
        %v324 = vsel %vm242, %v322, 0
        %326 = vmatprep.subr.mxu0 0.0
        %327 = vmatpush1.msra.mxu0 %v320
        %328 = vmatprep.subr.mxu0 0.0
        %329 = vmatpush1.msra.mxu0 %v321
        %330 = vmatprep.subr.mxu0 0.0
        %331 = vmatpush1.msra.mxu0 0.0
        %332 = vmatprep.subr.mxu0 0.0
        %333 = vmatpush1.msra.mxu0 0.0
        %334 = vmatprep.subr.mxu0 0.0
        %335 = vmatpush1.msra.mxu0 0.0
        %336 = vmatprep.subr.mxu0 0.0
        %337 = vmatpush1.msra.mxu0 0.0
        %338 = vmatprep.subr.mxu0 0.0
        %339 = vmatpush1.msra.mxu0 0.0
        %340 = vmatprep.subr.mxu0 0.0
        %341 = vmatpush1.msra.mxu0 0.0
        %342 = vmatprep.subr.mxu0 0.0
        %343 = vmatpush1.msra.mxu0 0.0
        %344 = vmatprep.subr.mxu0 0.0
        %345 = vmatpush1.msra.mxu0 0.0
        %346 = vmatprep.subr.mxu0 0.0
        %347 = vmatpush1.msra.mxu0 0.0
        %348 = vmatprep.subr.mxu0 0.0
        %349 = vmatpush1.msra.mxu0 0.0
        %350 = vmatprep.subr.mxu0 0.0
        %351 = vmatpush1.msra.mxu0 0.0
        %352 = vmatprep.subr.mxu0 0.0
        %353 = vmatpush1.msra.mxu0 0.0
        %354 = vmatprep.subr.mxu0 0.0
        %355 = vmatpush1.msra.mxu0 0.0
        %356 = vmatprep.subr.mxu0 0.0
        %357 = vmatpush1.msra.mxu0 0.0
        %358 = vmatprep.subr.mxu0 0.0
        %359 = vmatpush1.msra.mxu0 0.0
        %360 = vmatprep.subr.mxu0 0.0
        %361 = vmatpush1.msra.mxu0 0.0
        %362 = vmatprep.subr.mxu0 0.0
        %363 = vmatpush1.msra.mxu0 0.0
        %364 = vmatprep.subr.mxu0 0.0
        %365 = vmatpush1.msra.mxu0 0.0
        %366 = vmatprep.subr.mxu0 0.0
        %367 = vmatpush1.msra.mxu0 0.0
        %368 = vmatprep.subr.mxu0 0.0
        %369 = vmatpush1.msra.mxu0 0.0
        %370 = vmatprep.subr.mxu0 0.0
        %371 = vmatpush1.msra.mxu0 0.0
        %372 = vmatprep.subr.mxu0 0.0
        %373 = vmatpush1.msra.mxu0 0.0
        %374 = vmatprep.subr.mxu0 0.0
        %375 = vmatpush1.msra.mxu0 0.0
        %376 = vmatprep.subr.mxu0 0.0
        %377 = vmatpush1.msra.mxu0 0.0
        %378 = vmatprep.subr.mxu0 0.0
        %379 = vmatpush1.msra.mxu0 0.0
        %380 = vmatprep.subr.mxu0 0.0
        %381 = vmatpush1.msra.mxu0 0.0
        %382 = vmatprep.subr.mxu0 0.0
        %383 = vmatpush1.msra.mxu0 0.0
        %384 = vmatprep.subr.mxu0 0.0
        %385 = vmatpush1.msra.mxu0 0.0
        %386 = vmatprep.subr.mxu0 0.0
        %387 = vmatpush1.msra.mxu0 0.0
        %388 = vmatprep.subr.mxu0 0.0
        %389 = vmatpush1.msra.mxu0 0.0
        %390 = vmatprep.mubr.f32.mxu0 0.0
        %391 = vmatmul.mubr.f32.gmra.mrb[0].mxu0 %v324
        %v392 = vpop.f32.mrb[0].mxu0
        %v393 = vadd.f32 0.0, %v392
        %v394 = vpop.f32.mrb[0].mxu0
        %395 = vdwg.mxu0
        %vm396 = vcmp.gt.f32.partialorder %v393, 3.5
        %v397 = vsel %vm396, 0.0, %v313
        %398 = vst [vmem:[%s232] sm:$0xf] %v397
        %s399 = sand.u32 %s134, 1
        %s400 = scalar_lea.sflag [#allocation4], %s399
        %s401 = sand.u32 %s134, 1
        %s402 = smul.addr %s401, 4
        %s403 = scalar_lea.vmem [#allocation5], %s402
        // Predicated region
        $region41: #{tpu_custom_call.1} parent=35 // pred_check
          %p404 = pneg %p144
        $region42: #{tpu_custom_call.1} parent=35 // pred_check_branch
          %406 = sbr.rel (%p404) target = $region44
        $region43: #{tpu_custom_call.1} parent=35 // pred_region
          %s408 = ssub.s32 64, 64
          %409 = vsyncadd %s400, %s408
          %s410 = sadd.s32 %s26, %s25
          %s411 = smul.addr %s410, 64
          %s412 = scalar_lea.hbm %s4, %s411
          %s414 = sshll.u32 %s403, 4
          %s415 = int_to_ptr.vmem [resolvable:$true] %s414
          %417 = dma.vmem_to_hbm [thread:$0]  %s415, 64, %s412, %s400
        $region44: #{tpu_custom_call.1} parent=35 // pred_fallthru
          _
      $region36: #{tpu_custom_call.1} parent=5 // pred_fallthru
        _
      %p418 = scmp.le.s32.totalorder 2, %s16
      // Predicated region
      $region45: #{tpu_custom_call.1} parent=5 // pred_check
        %p419 = pneg %p418
      $region46: #{tpu_custom_call.1} parent=5 // pred_check_branch
        %421 = sbr.rel (%p419) target = $region48
      $region47: #{tpu_custom_call.1} parent=5 // pred_region
        %s422 = ssub.s32 %s16, 2
        // Predicated region
        $region49: #{tpu_custom_call.1} parent=47 // pred_check
          %p423 = pneg %p150
        $region50: #{tpu_custom_call.1} parent=47 // pred_check_branch
          %425 = sbr.rel (%p423) target = $region52
        $region51: #{tpu_custom_call.1} parent=47 // pred_region
          %s426 = sand.u32 %s135, 1
          %s427 = scalar_lea.sflag [#allocation4], %s426
          %s428 = sand.u32 %s135, 1
          %s429 = smul.addr %s428, 4
          %s430 = scalar_lea.vmem [#allocation5], %s429
          %431 = dma.done %s427, 64
        $region52: #{tpu_custom_call.1} parent=47 // pred_fallthru
          _
      $region48: #{tpu_custom_call.1} parent=5 // pred_fallthru
        _
    $region6: #{tpu_custom_call.1} parent=1 // loop_footer
      %s20 = sadd.s32 1, %s16
    $region7: #{tpu_custom_call.1} parent=1 // loop_footer_branch
      %15 = sbr.rel target = $region3
    $region8: #{tpu_custom_call.1} parent=1 // loop_exit
      _
    %432 = vsyncpa [#allocation3], 1
    %s433 = scalar_lea.sflag [#allocation3], 1
    %434 = vsyncpa %s433, 1
    %435 = vsyncpa [#allocation4], 1
    %s436 = scalar_lea.sflag [#allocation4], 1
    %437 = vsyncpa %s436, 1

</llo_original>
